<compile_context>
chip_gen: v7x
topology: tpu7x:2x2x1
jax: 0.10.0
libtpu: 0.0.40
codegen_flags: <defaults>
</compile_context>

<pallas_src>
import math

import jax
import jax.numpy as jnp
from jax.experimental import pallas as pl
from jax.experimental.pallas import tpu as pltpu


def _round_up(x, m):
  return ((x + m - 1) // m) * m


def _make_class_kernel(n_rows, tile_m, way_pad, apply_tail_mask):
  """Build the kernel body (closes over static shape facts)."""

  def kernel(x_ref, sp_ref, w1_ref, b1_ref, w2_ref, b2_ref,
             w3_ref, b3_ref, w4_ref, b4_ref, out_ref, acc_ref):
    i = pl.program_id(0)

    @pl.when(i == 0)
    def _init():
      acc_ref[...] = jnp.zeros_like(acc_ref)

    x = x_ref[...]                                      # (tile_m, D) f32
    # psi: Linear -> ReLU -> Linear -> ReLU  (bf16 MXU operands, f32 accumulate)
    h = jnp.maximum(
        jnp.dot(x.astype(jnp.bfloat16), w1_ref[...],
                preferred_element_type=jnp.float32) + b1_ref[...], 0.0)
    p = jnp.maximum(
        jnp.dot(h.astype(jnp.bfloat16), w2_ref[...],
                preferred_element_type=jnp.float32) + b2_ref[...], 0.0)
    psi_out = x + p                                     # residual, f32

    # Class-mean as one MXU matmul: S^T (way_pad, tile_m) @ psi_out (tile_m, D).
    # S^T holds 1/(ratio*shot) per (row -> class).  The same resident block is
    # valid for every tile because tile_m % way == 0; padded tail rows (global
    # row >= n_rows) are zeroed out of S^T in-kernel.
    s = sp_ref[...]
    if apply_tail_mask:
      col = (jax.lax.broadcasted_iota(jnp.int32, (way_pad, tile_m), 1)
             + i * tile_m)
      s = jnp.where(col < n_rows, s, 0.0)

    acc_ref[...] += jnp.dot(s, psi_out, preferred_element_type=jnp.float32)

    @pl.when(i == pl.num_programs(0) - 1)
    def _finalize():
      rho_in = acc_ref[...]                             # (way_pad, D) f32
      r1 = jnp.maximum(
          jnp.dot(rho_in, w3_ref[...],
                  preferred_element_type=jnp.float32) + b3_ref[...], 0.0)
      out_ref[...] = (
          jnp.dot(r1, w4_ref[...],
                  preferred_element_type=jnp.float32) + b4_ref[...])

  return kernel


def init_set_function_params(key, input_dimension, output_dimension):
  """Deterministic synthetic parameters (weights stored as (in, out))."""
  ks = jax.random.split(key, 8)
  d, o = input_dimension, output_dimension
  scale = 0.05
  return {
      "w1": jax.random.normal(ks[0], (d, d), jnp.float32) * scale,
      "b1": jax.random.normal(ks[1], (1, d), jnp.float32) * scale,
      "w2": jax.random.normal(ks[2], (d, d), jnp.float32) * scale,
      "b2": jax.random.normal(ks[3], (1, d), jnp.float32) * scale,
      "w3": jax.random.normal(ks[4], (d, d), jnp.float32) * scale,
      "b3": jax.random.normal(ks[5], (1, d), jnp.float32) * scale,
      "w4": jax.random.normal(ks[6], (d, o), jnp.float32) * scale,
      "b4": jax.random.normal(ks[7], (1, o), jnp.float32) * scale,
  }


def set_function_forward(params, x, level, shot=None, way=None,
                         neg_pre=None, ratio=1, tile_m=512):
  if level == "sample":
    return x
  if level != "class":
    raise NotImplementedError(
        "Only 'class' and 'sample' levels are implemented in Pallas.")

  n, d = x.shape
  assert d == 128, "module hard-codes feature dim 128 via .view(..., 128)"
  assert n == ratio * shot * way, "x rows must equal ratio*shot*way"
  out_dim = params["w4"].shape[1]

  # Padded extents: lane-dense output, sublane-dense accumulator.
  way_pad = _round_up(max(way, 8), 8)
  out_pad = _round_up(max(out_dim, 128), 128)

  # Row tile: multiple of lcm(8, way) so the class pattern repeats per tile and
  # a single resident S^T block covers every tile; capped by the requested tile
  # size and shrunk for small episodes so tiny N does not pay full-tile padding.
  lcm_way = (8 * way) // math.gcd(8, way)
  tile_cap = max(lcm_way, (tile_m // lcm_way) * lcm_way)
  tile_m = min(tile_cap, _round_up(n, lcm_way))
  n_pad = _round_up(n, tile_m)
  grid = (n_pad // tile_m,)
  apply_tail_mask = (n_pad != n)

  x_pad = x.astype(jnp.float32)
  if n_pad != n:
    x_pad = jnp.pad(x_pad, ((0, n_pad - n), (0, 0)))

  # Resident averaging block S^T: (way_pad, tile_m); column j -> class j % way,
  # weight 1/(ratio*shot); rows cls >= way are zero automatically.
  col = jnp.arange(tile_m, dtype=jnp.int32)
  cls = jnp.arange(way_pad, dtype=jnp.int32)
  s_pattern = jnp.where((col[None, :] % way) == cls[:, None],
                        jnp.float32(1.0 / (ratio * shot)), jnp.float32(0.0))

  # Weights: bf16 for the two big psi matmuls, f32 (lane-padded) for rho.
  w1 = params["w1"].astype(jnp.bfloat16)
  w2 = params["w2"].astype(jnp.bfloat16)
  w3 = params["w3"].astype(jnp.float32)
  w4 = jnp.zeros((d, out_pad), jnp.float32).at[:, :out_dim].set(params["w4"])
  b4 = jnp.zeros((1, out_pad), jnp.float32).at[:, :out_dim].set(params["b4"])

  resident = lambda shape: pl.BlockSpec(shape, lambda i: (0, 0))

  flops = int(
      2 * n_pad * d * d * 2            # two psi matmuls
      + 2 * way_pad * n_pad * d        # class-mean matmul
      + 2 * way_pad * d * d            # rho matmul 1
      + 2 * way_pad * d * out_pad)     # rho matmul 2
  bytes_accessed = int(
      4 * n_pad * d                                       # x stream
      + 4 * way_pad * tile_m                              # resident S^T block
      + 2 * 2 * d * d + 4 * d * d + 4 * d * out_pad       # weights
      + 4 * (3 * d + out_pad)                             # biases
      + 4 * way_pad * out_pad)                            # output

  # VMEM budget: double-buffered x stream + resident weights/pattern + headroom.
  stream_bytes = 2 * tile_m * d * 4
  resident_bytes = 2 * (way_pad * tile_m * 4
                        + 2 * d * d * 2
                        + d * d * 4 + d * out_pad * 4
                        + (3 * d + out_pad) * 4)
  fixed_bytes = (way_pad * d + way_pad * out_pad) * 4
  vmem_limit_bytes = int(min(
      128 << 20,
      max(stream_bytes + resident_bytes + fixed_bytes + (8 << 20), 32 << 20)))

  kernel = _make_class_kernel(n, tile_m, way_pad, apply_tail_mask)

  out_padded = pl.pallas_call(
      kernel,
      out_shape=jax.ShapeDtypeStruct((way_pad, out_pad), jnp.float32),
      grid_spec=pltpu.PrefetchScalarGridSpec(
          num_scalar_prefetch=0,
          grid=grid,
          in_specs=[
              pl.BlockSpec((tile_m, d), lambda i: (i, 0)),   # x row tiles
              resident((way_pad, tile_m)),                   # S^T pattern
              resident((d, d)),        # w1 (bf16)
              resident((1, d)),        # b1
              resident((d, d)),        # w2 (bf16)
              resident((1, d)),        # b2
              resident((d, d)),        # w3
              resident((1, d)),        # b3
              resident((d, out_pad)),  # w4 (padded)
              resident((1, out_pad)),  # b4 (padded)
          ],
          out_specs=pl.BlockSpec((way_pad, out_pad), lambda i: (0, 0)),
          scratch_shapes=[pltpu.VMEM((way_pad, d), jnp.float32)],
      ),
      compiler_params=pltpu.CompilerParams(
          dimension_semantics=("arbitrary",),   # row axis reduces into acc
          vmem_limit_bytes=vmem_limit_bytes),
      cost_estimate=pl.CostEstimate(
          flops=flops, transcendentals=0, bytes_accessed=bytes_accessed),
  )(x_pad, s_pattern, w1, params["b1"], w2, params["b2"],
    w3, params["b3"], w4, b4)

  return out_padded[:way, :out_dim]


def _reference_forward(params, x, shot, way, ratio):
  """Pure-JAX f32 reference mirroring the PyTorch 'class' branch."""
  h = jnp.maximum(x @ params["w1"] + params["b1"], 0.0)
  p = jnp.maximum(h @ params["w2"] + params["b2"], 0.0)
  psi_out = x + p
  d = x.shape[-1]
  rho_in = psi_out.reshape(ratio, shot * way, d).mean(0)
  rho_in = rho_in.reshape(shot, way, d).mean(0)
  r1 = jnp.maximum(rho_in @ params["w3"] + params["b3"], 0.0)
  return r1 @ params["w4"] + params["b4"]


def _run_case(params, key, out_dim, ratio, shot, way, tile_m):
  n = ratio * shot * way
  x = jax.random.normal(key, (n, 128), jnp.float32)
  out = set_function_forward(params, x, level="class",
                             shot=shot, way=way, ratio=ratio, tile_m=tile_m)
  out = jax.block_until_ready(out)
  ref = _reference_forward(params, x, shot, way, ratio)
  assert out.shape == (way, out_dim), out.shape
  # bf16 MXU operands on the psi matmuls -> relaxed tolerance vs f32 reference.
  err = float(jnp.max(jnp.abs(out - ref)))
  assert jnp.allclose(out, ref, atol=2e-2, rtol=2e-2), err


if __name__ == "__main__":
  key = jax.random.PRNGKey(0)
  k_param, k1, k2, k3 = jax.random.split(key, 4)

  input_dimension = 128   # fixed by .view(..., 128) in the PyTorch module
  output_dimension = 64
  params = init_set_function_params(k_param, input_dimension, output_dimension)

  # sample level: passthrough
  xs = jax.random.normal(k1, (8, input_dimension), jnp.float32)
  assert set_function_forward(params, xs, level="sample").shape == xs.shape

  # class level: tiny episode (single tile, no padding)
  _run_case(params, k1, output_dimension, ratio=1, shot=2, way=4, tile_m=512)
  # class level: 5-way episode (tile_m multiple of lcm(8,5)=40, tail mask path)
  _run_case(params, k2, output_dimension, ratio=1, shot=3, way=5, tile_m=512)
  # class level: multi-tile accumulation over the grid (grid = 2 steps)
  _run_case(params, k3, output_dimension, ratio=4, shot=8, way=4, tile_m=64)

  print("KERNEL_OK")
</pallas_src>

<mosaic_0001>
module attributes {stable_mosaic.version = 11 : i64} {
  func.func @kernel(%arg0: i32, %arg1: memref<8x128xf32, #tpu.memory_space<vmem>>, %arg2: memref<8x8xf32, #tpu.memory_space<vmem>>, %arg3: memref<128x128xbf16, #tpu.memory_space<vmem>>, %arg4: memref<1x128xf32, #tpu.memory_space<vmem>>, %arg5: memref<128x128xbf16, #tpu.memory_space<vmem>>, %arg6: memref<1x128xf32, #tpu.memory_space<vmem>>, %arg7: memref<128x128xf32, #tpu.memory_space<vmem>>, %arg8: memref<1x128xf32, #tpu.memory_space<vmem>>, %arg9: memref<128x128xf32, #tpu.memory_space<vmem>>, %arg10: memref<1x128xf32, #tpu.memory_space<vmem>>, %arg11: memref<8x128xf32, #tpu.memory_space<vmem>>, %arg12: memref<8x128xf32, #tpu.memory_space<vmem>>) attributes {dimension_semantics = [#tpu.dimension_semantics<arbitrary>], iteration_bounds = array<i64: 1>, scalar_prefetch = 0 : i64, scratch_operands = 1 : i64, tpu.core_type = #tpu.core_type<tc>, window_params = [{transform_indices = @transform_0, window_bounds = array<i64: 8, 128>}, {pipeline_mode = #tpu.pipeline_mode<synchronous>, transform_indices = @transform_1, window_bounds = array<i64: 8, 8>}, {pipeline_mode = #tpu.pipeline_mode<synchronous>, transform_indices = @transform_2, window_bounds = array<i64: 128, 128>}, {pipeline_mode = #tpu.pipeline_mode<synchronous>, transform_indices = @transform_3, window_bounds = array<i64: 1, 128>}, {pipeline_mode = #tpu.pipeline_mode<synchronous>, transform_indices = @transform_4, window_bounds = array<i64: 128, 128>}, {pipeline_mode = #tpu.pipeline_mode<synchronous>, transform_indices = @transform_5, window_bounds = array<i64: 1, 128>}, {pipeline_mode = #tpu.pipeline_mode<synchronous>, transform_indices = @transform_6, window_bounds = array<i64: 128, 128>}, {pipeline_mode = #tpu.pipeline_mode<synchronous>, transform_indices = @transform_7, window_bounds = array<i64: 1, 128>}, {pipeline_mode = #tpu.pipeline_mode<synchronous>, transform_indices = @transform_8, window_bounds = array<i64: 128, 128>}, {pipeline_mode = #tpu.pipeline_mode<synchronous>, transform_indices = @transform_9, window_bounds = array<i64: 1, 128>}, {pipeline_mode = #tpu.pipeline_mode<synchronous>, transform_indices = @transform_10, window_bounds = array<i64: 8, 128>}]} {
    %c0_i32 = arith.constant 0 : i32
    %0 = arith.cmpi eq, %arg0, %c0_i32 : i32
    %1 = arith.extui %0 : i1 to i32
    %c0_i32_0 = arith.constant 0 : i32
    %2 = arith.cmpi ne, %1, %c0_i32_0 : i32
    scf.if %2 {
      %cst_22 = arith.constant 0.000000e+00 : f32
      %29 = vector.broadcast %cst_22 : f32 to vector<8x128xf32>
      %c0_23 = arith.constant 0 : index
      %c0_24 = arith.constant 0 : index
      %30 = vector.load %arg12[%c0_23, %c0_24] : memref<8x128xf32, #tpu.memory_space<vmem>>, vector<8x128xf32>
      tpu.vector_store %arg12[%c0_23, %c0_24], %29 {strides = array<i32>} : memref<8x128xf32, #tpu.memory_space<vmem>>, vector<8x128xf32>,
    } else {
    }
    %c0 = arith.constant 0 : index
    %c0_1 = arith.constant 0 : index
    %3 = vector.load %arg1[%c0, %c0_1] : memref<8x128xf32, #tpu.memory_space<vmem>>, vector<8x128xf32>
    %4 = arith.truncf %3 : vector<8x128xf32> to vector<8x128xbf16>
    %c0_2 = arith.constant 0 : index
    %c0_3 = arith.constant 0 : index
    %5 = vector.load %arg3[%c0_2, %c0_3] : memref<128x128xbf16, #tpu.memory_space<vmem>>, vector<128x128xbf16>
    %cst = arith.constant dense<0.000000e+00> : vector<8x128xf32>
    %6 = tpu.matmul %4, %5, %cst {dimension_numbers = #tpu.dot_dimension_numbers<[1], [0], [0], [1], [0, 0, 1, 1], [], []>} : vector<8x128xbf16>, vector<128x128xbf16>, vector<8x128xf32> -> vector<8x128xf32>
    %c0_4 = arith.constant 0 : index
    %c0_5 = arith.constant 0 : index
    %7 = vector.load %arg4[%c0_4, %c0_5] : memref<1x128xf32, #tpu.memory_space<vmem>>, vector<1x128xf32>
    %8 = vector.broadcast %7 : vector<1x128xf32> to vector<8x128xf32>
    %9 = arith.addf %6, %8 : vector<8x128xf32>
    %cst_6 = arith.constant 0.000000e+00 : f32
    %10 = vector.broadcast %cst_6 : f32 to vector<8x128xf32>
    %11 = arith.maximumf %9, %10 : vector<8x128xf32>
    %12 = arith.truncf %11 : vector<8x128xf32> to vector<8x128xbf16>
    %c0_7 = arith.constant 0 : index
    %c0_8 = arith.constant 0 : index
    %13 = vector.load %arg5[%c0_7, %c0_8] : memref<128x128xbf16, #tpu.memory_space<vmem>>, vector<128x128xbf16>
    %cst_9 = arith.constant dense<0.000000e+00> : vector<8x128xf32>
    %14 = tpu.matmul %12, %13, %cst_9 {dimension_numbers = #tpu.dot_dimension_numbers<[1], [0], [0], [1], [0, 0, 1, 1], [], []>} : vector<8x128xbf16>, vector<128x128xbf16>, vector<8x128xf32> -> vector<8x128xf32>
    %c0_10 = arith.constant 0 : index
    %c0_11 = arith.constant 0 : index
    %15 = vector.load %arg6[%c0_10, %c0_11] : memref<1x128xf32, #tpu.memory_space<vmem>>, vector<1x128xf32>
    %16 = vector.broadcast %15 : vector<1x128xf32> to vector<8x128xf32>
    %17 = arith.addf %14, %16 : vector<8x128xf32>
    %cst_12 = arith.constant 0.000000e+00 : f32
    %18 = vector.broadcast %cst_12 : f32 to vector<8x128xf32>
    %19 = arith.maximumf %17, %18 : vector<8x128xf32>
    %20 = arith.addf %3, %19 : vector<8x128xf32>
    %c0_13 = arith.constant 0 : index
    %c0_14 = arith.constant 0 : index
    %21 = vector.load %arg2[%c0_13, %c0_14] : memref<8x8xf32, #tpu.memory_space<vmem>>, vector<8x8xf32>
    %c0_15 = arith.constant 0 : index
    %c0_16 = arith.constant 0 : index
    %22 = vector.load %arg12[%c0_15, %c0_16] : memref<8x128xf32, #tpu.memory_space<vmem>>, vector<8x128xf32>
    %cst_17 = arith.constant dense<0.000000e+00> : vector<8x128xf32>
    %23 = tpu.matmul %21, %20, %cst_17 {dimension_numbers = #tpu.dot_dimension_numbers<[1], [0], [0], [1], [0, 0, 1, 1], [], []>} : vector<8x8xf32>, vector<8x128xf32>, vector<8x128xf32> -> vector<8x128xf32>
    %24 = arith.addf %22, %23 : vector<8x128xf32>
    %c0_18 = arith.constant 0 : index
    %c0_19 = arith.constant 0 : index
    %25 = vector.load %arg12[%c0_18, %c0_19] : memref<8x128xf32, #tpu.memory_space<vmem>>, vector<8x128xf32>
    tpu.vector_store %arg12[%c0_18, %c0_19], %24 {strides = array<i32>} : memref<8x128xf32, #tpu.memory_space<vmem>>, vector<8x128xf32>,
    %c0_i32_20 = arith.constant 0 : i32
    %26 = arith.cmpi eq, %arg0, %c0_i32_20 : i32
    %27 = arith.extui %26 : i1 to i32
    %c0_i32_21 = arith.constant 0 : i32
    %28 = arith.cmpi ne, %27, %c0_i32_21 : i32
    scf.if %28 {
      %c0_22 = arith.constant 0 : index
      %c0_23 = arith.constant 0 : index
      %29 = vector.load %arg12[%c0_22, %c0_23] : memref<8x128xf32, #tpu.memory_space<vmem>>, vector<8x128xf32>
      %c0_24 = arith.constant 0 : index
      %c0_25 = arith.constant 0 : index
      %30 = vector.load %arg7[%c0_24, %c0_25] : memref<128x128xf32, #tpu.memory_space<vmem>>, vector<128x128xf32>
      %cst_26 = arith.constant dense<0.000000e+00> : vector<8x128xf32>
      %31 = tpu.matmul %29, %30, %cst_26 {dimension_numbers = #tpu.dot_dimension_numbers<[1], [0], [0], [1], [0, 0, 1, 1], [], []>} : vector<8x128xf32>, vector<128x128xf32>, vector<8x128xf32> -> vector<8x128xf32>
      %c0_27 = arith.constant 0 : index
      %c0_28 = arith.constant 0 : index
      %32 = vector.load %arg8[%c0_27, %c0_28] : memref<1x128xf32, #tpu.memory_space<vmem>>, vector<1x128xf32>
      %33 = vector.broadcast %32 : vector<1x128xf32> to vector<8x128xf32>
      %34 = arith.addf %31, %33 : vector<8x128xf32>
      %cst_29 = arith.constant 0.000000e+00 : f32
      %35 = vector.broadcast %cst_29 : f32 to vector<8x128xf32>
      %36 = arith.maximumf %34, %35 : vector<8x128xf32>
      %c0_30 = arith.constant 0 : index
      %c0_31 = arith.constant 0 : index
      %37 = vector.load %arg9[%c0_30, %c0_31] : memref<128x128xf32, #tpu.memory_space<vmem>>, vector<128x128xf32>
      %cst_32 = arith.constant dense<0.000000e+00> : vector<8x128xf32>
      %38 = tpu.matmul %36, %37, %cst_32 {dimension_numbers = #tpu.dot_dimension_numbers<[1], [0], [0], [1], [0, 0, 1, 1], [], []>} : vector<8x128xf32>, vector<128x128xf32>, vector<8x128xf32> -> vector<8x128xf32>
      %c0_33 = arith.constant 0 : index
      %c0_34 = arith.constant 0 : index
      %39 = vector.load %arg10[%c0_33, %c0_34] : memref<1x128xf32, #tpu.memory_space<vmem>>, vector<1x128xf32>
      %40 = vector.broadcast %39 : vector<1x128xf32> to vector<8x128xf32>
      %41 = arith.addf %38, %40 : vector<8x128xf32>
      %c0_35 = arith.constant 0 : index
      %c0_36 = arith.constant 0 : index
      %42 = vector.load %arg11[%c0_35, %c0_36] : memref<8x128xf32, #tpu.memory_space<vmem>>, vector<8x128xf32>
      tpu.vector_store %arg11[%c0_35, %c0_36], %41 {strides = array<i32>} : memref<8x128xf32, #tpu.memory_space<vmem>>, vector<8x128xf32>,
    } else {
    }
    return
  }
  func.func @transform_0(%arg0: i32) -> (i32, i32) {
    %c0_i32 = arith.constant 0 : i32
    %c0_i32_0 = arith.constant 0 : i32
    return %arg0, %c0_i32 : i32, i32
  }
  func.func @transform_1(%arg0: i32) -> (i32, i32) {
    %c0_i32 = arith.constant 0 : i32
    %c0_i32_0 = arith.constant 0 : i32
    %c0_i32_1 = arith.constant 0 : i32
    return %c0_i32, %c0_i32_0 : i32, i32
  }
  func.func @transform_2(%arg0: i32) -> (i32, i32) {
    %c0_i32 = arith.constant 0 : i32
    %c0_i32_0 = arith.constant 0 : i32
    %c0_i32_1 = arith.constant 0 : i32
    return %c0_i32, %c0_i32_0 : i32, i32
  }
  func.func @transform_3(%arg0: i32) -> (i32, i32) {
    %c0_i32 = arith.constant 0 : i32
    %c0_i32_0 = arith.constant 0 : i32
    %c0_i32_1 = arith.constant 0 : i32
    return %c0_i32, %c0_i32_0 : i32, i32
  }
  func.func @transform_4(%arg0: i32) -> (i32, i32) {
    %c0_i32 = arith.constant 0 : i32
    %c0_i32_0 = arith.constant 0 : i32
    %c0_i32_1 = arith.constant 0 : i32
    return %c0_i32, %c0_i32_0 : i32, i32
  }
  func.func @transform_5(%arg0: i32) -> (i32, i32) {
    %c0_i32 = arith.constant 0 : i32
    %c0_i32_0 = arith.constant 0 : i32
    %c0_i32_1 = arith.constant 0 : i32
    return %c0_i32, %c0_i32_0 : i32, i32
  }
  func.func @transform_6(%arg0: i32) -> (i32, i32) {
    %c0_i32 = arith.constant 0 : i32
    %c0_i32_0 = arith.constant 0 : i32
    %c0_i32_1 = arith.constant 0 : i32
    return %c0_i32, %c0_i32_0 : i32, i32
  }
  func.func @transform_7(%arg0: i32) -> (i32, i32) {
    %c0_i32 = arith.constant 0 : i32
    %c0_i32_0 = arith.constant 0 : i32
    %c0_i32_1 = arith.constant 0 : i32
    return %c0_i32, %c0_i32_0 : i32, i32
  }
  func.func @transform_8(%arg0: i32) -> (i32, i32) {
    %c0_i32 = arith.constant 0 : i32
    %c0_i32_0 = arith.constant 0 : i32
    %c0_i32_1 = arith.constant 0 : i32
    return %c0_i32, %c0_i32_0 : i32, i32
  }
  func.func @transform_9(%arg0: i32) -> (i32, i32) {
    %c0_i32 = arith.constant 0 : i32
    %c0_i32_0 = arith.constant 0 : i32
    %c0_i32_1 = arith.constant 0 : i32
    return %c0_i32, %c0_i32_0 : i32, i32
  }
  func.func @transform_10(%arg0: i32) -> (i32, i32) {
    %c0_i32 = arith.constant 0 : i32
    %c0_i32_0 = arith.constant 0 : i32
    %c0_i32_1 = arith.constant 0 : i32
    return %c0_i32, %c0_i32_0 : i32, i32
  }
}

</mosaic_0001>

<llo_original>
// kernel: tpu_custom_call.1
$region0: #{tpu_custom_call.1}
  #allocation0 [shape = 'u32[]', space=smem, size = 0x4, offset = 0x4, fixed_abs, tag = 'smem constant byte address 0x4 - core index']
  #allocation1 [shape = 'u32[144,128]{1,0:T(1,128)}', space=vmem, size = 0x12000, scoped, tag = 'internal scratch']
  #allocation2 [shape = 'f32[8,128]{1,0:T(8,128)}', space=vmem, size = 0x1000, scoped, tag = 'scratch operand']
  %s0 = inlined_call_operand.hbm [shape: f32[8,128], index: 0, kind: input, shape index: {}]
  %s1 = inlined_call_operand.hbm [shape: f32[8,8], index: 1, kind: input, shape index: {}]
  %s2 = inlined_call_operand.hbm [shape: bf16[128,128], index: 2, kind: input, shape index: {}]
  %s3 = inlined_call_operand.vmem [shape: f32[1,128], index: 3, kind: input, shape index: {}]
  %s4 = inlined_call_operand.hbm [shape: bf16[128,128], index: 4, kind: input, shape index: {}]
  %s5 = inlined_call_operand.vmem [shape: f32[1,128], index: 5, kind: input, shape index: {}]
  %s6 = inlined_call_operand.hbm [shape: f32[128,128], index: 6, kind: input, shape index: {}]
  %s7 = inlined_call_operand.vmem [shape: f32[1,128], index: 7, kind: input, shape index: {}]
  %s8 = inlined_call_operand.hbm [shape: f32[128,128], index: 8, kind: input, shape index: {}]
  %s9 = inlined_call_operand.vmem [shape: f32[1,128], index: 9, kind: input, shape index: {}]
  %s10 = inlined_call_operand.hbm [shape: f32[8,128], index: 10, kind: output, shape index: {}]
  %s11 = sld [smem:[#allocation0]]
  $region82: #{tpu_custom_call.1} parent=0
    _
  %s13 = ssub.s32 1, %s11
  %s14 = scalar_select 0, %s13, %s11
  $region1: #{tpu_custom_call.1} parent=0
    #allocation3 [shape = 'u8[4096]{0}', space=vmem, size = 0x1000, scoped, tag = 'input window, operand 0, single buffered']
    #allocation4 [shape = 's32[1]{0}', space=sflag, size = 0x4, scoped, tag = 'scoped memory for tpu_custom_call.1']
    #allocation5 [shape = 's32[1]{0}', space=sflag, size = 0x4, scoped, tag = 'scoped memory for tpu_custom_call.1']
    #allocation6 [shape = 'u8[4096]{0}', space=vmem, size = 0x1000, scoped, tag = 'input window, operand 1, single buffered']
    #allocation7 [shape = 's32[1]{0}', space=sflag, size = 0x4, scoped, tag = 'scoped memory for tpu_custom_call.1']
    #allocation8 [shape = 'u8[32768]{0}', space=vmem, size = 0x8000, scoped, tag = 'input window, operand 2, single buffered']
    #allocation9 [shape = 'u8[32768]{0}', space=vmem, size = 0x8000, scoped, tag = 'input window, operand 4, single buffered']
    #allocation10 [shape = 's32[1]{0}', space=sflag, size = 0x4, scoped, tag = 'scoped memory for tpu_custom_call.1']
    #allocation11 [shape = 'u8[65536]{0}', space=vmem, size = 0x10000, scoped, tag = 'input window, operand 6, single buffered']
    #allocation12 [shape = 'u8[65536]{0}', space=vmem, size = 0x10000, scoped, tag = 'input window, operand 8, single buffered']
    #allocation13 [shape = 's32[1]{0}', space=sflag, size = 0x4, scoped, tag = 'scoped memory for tpu_custom_call.1']
    #allocation14 [shape = 'u8[4096]{0}', space=vmem, size = 0x1000, scoped, tag = 'output window, operand 0, single buffered']
    %15 = vsyncpa [#allocation4], 0
    %16 = vsyncpa [#allocation7], 0
    %17 = vsyncpa [#allocation10], 0
    %18 = vsyncpa [#allocation13], 0
    %19 = vsyncpa [#allocation5], 0
    // Predicated region
    $region2: #{tpu_custom_call.1} parent=1 // pred_check
      _
    $region3: #{tpu_custom_call.1} parent=1 // pred_check_branch
      %21 = sbr.rel (0) target = $region5
    $region4: #{tpu_custom_call.1} parent=1 // pred_region
      %s23 = ssub.s32 128, 128
      %24 = vsyncadd [#allocation4], %s23
      %s26 = sshll.u32 [#allocation3], 4
      %s27 = int_to_ptr.vmem [resolvable:$true] %s26
      %29 = dma.hbm_to_vmem [thread:$0]  %s0, 128, %s27, [#allocation4]
    $region5: #{tpu_custom_call.1} parent=1 // pred_fallthru
      _
    // Predicated region
    $region6: #{tpu_custom_call.1} parent=1 // pred_check
      _
    $region7: #{tpu_custom_call.1} parent=1 // pred_check_branch
      %31 = sbr.rel (0) target = $region9
    $region8: #{tpu_custom_call.1} parent=1 // pred_region
      %s33 = ssub.s32 128, 128
      %34 = vsyncadd [#allocation7], %s33
      %s36 = sshll.u32 [#allocation6], 4
      %s37 = int_to_ptr.vmem [resolvable:$true] %s36
      %39 = dma.hbm_to_vmem [thread:$0]  %s1, 128, %s37, [#allocation7]
    $region9: #{tpu_custom_call.1} parent=1 // pred_fallthru
      _
    // Predicated region
    $region10: #{tpu_custom_call.1} parent=1 // pred_check
      _
    $region11: #{tpu_custom_call.1} parent=1 // pred_check_branch
      %41 = sbr.rel (0) target = $region13
    $region12: #{tpu_custom_call.1} parent=1 // pred_region
      %s43 = ssub.s32 1024, 1024
      %44 = vsyncadd [#allocation7], %s43
      %s45 = sshll.u32 [#allocation8], 4
      %s46 = int_to_ptr.vmem [resolvable:$true] %s45
      %51 = dma.hbm_to_vmem [thread:$0]  %s2, 1024, %s46, [#allocation7], 64, 64, 4
    $region13: #{tpu_custom_call.1} parent=1 // pred_fallthru
      _
    // Predicated region
    $region14: #{tpu_custom_call.1} parent=1 // pred_check
      _
    $region15: #{tpu_custom_call.1} parent=1 // pred_check_branch
      %53 = sbr.rel (0) target = $region17
    $region16: #{tpu_custom_call.1} parent=1 // pred_region
      _
    $region17: #{tpu_custom_call.1} parent=1 // pred_fallthru
      _
    // Predicated region
    $region18: #{tpu_custom_call.1} parent=1 // pred_check
      _
    $region19: #{tpu_custom_call.1} parent=1 // pred_check_branch
      %55 = sbr.rel (0) target = $region21
    $region20: #{tpu_custom_call.1} parent=1 // pred_region
      %s57 = ssub.s32 1024, 1024
      %58 = vsyncadd [#allocation10], %s57
      %s59 = sshll.u32 [#allocation9], 4
      %s60 = int_to_ptr.vmem [resolvable:$true] %s59
      %65 = dma.hbm_to_vmem [thread:$0]  %s4, 1024, %s60, [#allocation10], 64, 64, 4
    $region21: #{tpu_custom_call.1} parent=1 // pred_fallthru
      _
    // Predicated region
    $region22: #{tpu_custom_call.1} parent=1 // pred_check
      _
    $region23: #{tpu_custom_call.1} parent=1 // pred_check_branch
      %67 = sbr.rel (0) target = $region25
    $region24: #{tpu_custom_call.1} parent=1 // pred_region
      _
    $region25: #{tpu_custom_call.1} parent=1 // pred_fallthru
      _
    // Predicated region
    $region26: #{tpu_custom_call.1} parent=1 // pred_check
      _
    $region27: #{tpu_custom_call.1} parent=1 // pred_check_branch
      %69 = sbr.rel (0) target = $region29
    $region28: #{tpu_custom_call.1} parent=1 // pred_region
      %s71 = ssub.s32 2048, 2048
      %72 = vsyncadd [#allocation10], %s71
      %s73 = sshll.u32 [#allocation11], 4
      %s74 = int_to_ptr.vmem [resolvable:$true] %s73
      %79 = dma.hbm_to_vmem [thread:$0]  %s6, 2048, %s74, [#allocation10], 128, 128, 8
    $region29: #{tpu_custom_call.1} parent=1 // pred_fallthru
      _
    // Predicated region
    $region30: #{tpu_custom_call.1} parent=1 // pred_check
      _
    $region31: #{tpu_custom_call.1} parent=1 // pred_check_branch
      %81 = sbr.rel (0) target = $region33
    $region32: #{tpu_custom_call.1} parent=1 // pred_region
      _
    $region33: #{tpu_custom_call.1} parent=1 // pred_fallthru
      _
    // Predicated region
    $region34: #{tpu_custom_call.1} parent=1 // pred_check
      _
    $region35: #{tpu_custom_call.1} parent=1 // pred_check_branch
      %83 = sbr.rel (0) target = $region37
    $region36: #{tpu_custom_call.1} parent=1 // pred_region
      %s85 = ssub.s32 2048, 2048
      %86 = vsyncadd [#allocation13], %s85
      %s87 = sshll.u32 [#allocation12], 4
      %s88 = int_to_ptr.vmem [resolvable:$true] %s87
      %93 = dma.hbm_to_vmem [thread:$0]  %s8, 2048, %s88, [#allocation13], 128, 128, 8
    $region37: #{tpu_custom_call.1} parent=1 // pred_fallthru
      _
    // Predicated region
    $region38: #{tpu_custom_call.1} parent=1 // pred_check
      _
    $region39: #{tpu_custom_call.1} parent=1 // pred_check_branch
      %95 = sbr.rel (0) target = $region41
    $region40: #{tpu_custom_call.1} parent=1 // pred_region
      _
    $region41: #{tpu_custom_call.1} parent=1 // pred_fallthru
      _
    // Predicated region
    $region42: #{tpu_custom_call.1} parent=1 // pred_check
      _
    $region43: #{tpu_custom_call.1} parent=1 // pred_check_branch
      %97 = sbr.rel (0) target = $region45
    $region44: #{tpu_custom_call.1} parent=1 // pred_region
      %98 = dma.done [#allocation4], 128
    $region45: #{tpu_custom_call.1} parent=1 // pred_fallthru
      _
    // Predicated region
    $region46: #{tpu_custom_call.1} parent=1 // pred_check
      _
    $region47: #{tpu_custom_call.1} parent=1 // pred_check_branch
      %100 = sbr.rel (0) target = $region49
    $region48: #{tpu_custom_call.1} parent=1 // pred_region
      %101 = dma.done [#allocation7], 128
    $region49: #{tpu_custom_call.1} parent=1 // pred_fallthru
      _
    // Predicated region
    $region50: #{tpu_custom_call.1} parent=1 // pred_check
      _
    $region51: #{tpu_custom_call.1} parent=1 // pred_check_branch
      %103 = sbr.rel (0) target = $region53
    $region52: #{tpu_custom_call.1} parent=1 // pred_region
      %104 = dma.done [#allocation7], 1024
    $region53: #{tpu_custom_call.1} parent=1 // pred_fallthru
      _
    // Predicated region
    $region54: #{tpu_custom_call.1} parent=1 // pred_check
      _
    $region55: #{tpu_custom_call.1} parent=1 // pred_check_branch
      %106 = sbr.rel (0) target = $region57
    $region56: #{tpu_custom_call.1} parent=1 // pred_region
      %107 = dma.done [#allocation10], 1024
    $region57: #{tpu_custom_call.1} parent=1 // pred_fallthru
      _
    // Predicated region
    $region58: #{tpu_custom_call.1} parent=1 // pred_check
      _
    $region59: #{tpu_custom_call.1} parent=1 // pred_check_branch
      %109 = sbr.rel (0) target = $region61
    $region60: #{tpu_custom_call.1} parent=1 // pred_region
      %110 = dma.done [#allocation10], 2048
    $region61: #{tpu_custom_call.1} parent=1 // pred_fallthru
      _
    // Predicated region
    $region62: #{tpu_custom_call.1} parent=1 // pred_check
      _
    $region63: #{tpu_custom_call.1} parent=1 // pred_check_branch
      %112 = sbr.rel (0) target = $region65
    $region64: #{tpu_custom_call.1} parent=1 // pred_region
      %113 = dma.done [#allocation13], 2048
    $region65: #{tpu_custom_call.1} parent=1 // pred_fallthru
      _
    %p115 = scmp.eq.s32.totalorder 0, 0
    // Predicated region
    $region66: #{tpu_custom_call.1} parent=1 // pred_check
      %p116 = pneg %p115
    $region67: #{tpu_custom_call.1} parent=1 // pred_check_branch
      %118 = sbr.rel (%p116) target = $region69
    $region68: #{tpu_custom_call.1} parent=1 // pred_region
      %119 = vst [vmem:[#allocation2] sm:$0xff] 0.0
    $region69: #{tpu_custom_call.1} parent=1 // pred_fallthru
      _
    %v120 = vld [vmem:[#allocation3] sm:$0xff]
    %v121 = vpack.c.bf16 %v120, %v120
    %v122 = vld [vmem:[#allocation8] sm:$0xf]
    %v123 = vld [vmem:[#allocation8 + $0x4] sm:$0xf]
    %v124 = vld [vmem:[#allocation8 + $0x8] sm:$0xf]
    %v125 = vld [vmem:[#allocation8 + $0xc] sm:$0xf]
    %v126 = vld [vmem:[#allocation8 + $0x10] sm:$0xf]
    %v127 = vld [vmem:[#allocation8 + $0x14] sm:$0xf]
    %v128 = vld [vmem:[#allocation8 + $0x18] sm:$0xf]
    %v129 = vld [vmem:[#allocation8 + $0x1c] sm:$0xf]
    %v130 = vld [vmem:[#allocation8 + $0x20] sm:$0xf]
    %v131 = vld [vmem:[#allocation8 + $0x24] sm:$0xf]
    %v132 = vld [vmem:[#allocation8 + $0x28] sm:$0xf]
    %v133 = vld [vmem:[#allocation8 + $0x2c] sm:$0xf]
    %v134 = vld [vmem:[#allocation8 + $0x30] sm:$0xf]
    %v135 = vld [vmem:[#allocation8 + $0x34] sm:$0xf]
    %v136 = vld [vmem:[#allocation8 + $0x38] sm:$0xf]
    %v137 = vld [vmem:[#allocation8 + $0x3c] sm:$0xf]
    %v138 = vld [vmem:[%s3] sm:$0x1]
    %v140 = vlaneseq
    %v141 = vshrl.u32 %v140, 7
    %v142 = vsub.s32 0, %v141
    %v143 = vrot.slane %v138, %v142
    %v161 = vunpack.c.l.b16 %v122
    %v162 = vunpack.c.l.b16 %v123
    %v163 = vunpack.c.l.b16 %v124
    %v164 = vunpack.c.l.b16 %v125
    %v165 = vunpack.c.l.b16 %v126
    %v166 = vunpack.c.l.b16 %v127
    %v167 = vunpack.c.l.b16 %v128
    %v168 = vunpack.c.l.b16 %v129
    %v169 = vunpack.c.l.b16 %v130
    %v170 = vunpack.c.l.b16 %v131
    %v171 = vunpack.c.l.b16 %v132
    %v172 = vunpack.c.l.b16 %v133
    %v173 = vunpack.c.l.b16 %v134
    %v174 = vunpack.c.l.b16 %v135
    %v175 = vunpack.c.l.b16 %v136
    %v176 = vunpack.c.l.b16 %v137
    %v177 = vpack.c.b16 %v162, %v161
    %v178 = vpack.c.b16 %v164, %v163
    %v179 = vpack.c.b16 %v166, %v165
    %v180 = vpack.c.b16 %v168, %v167
    %v181 = vpack.c.b16 %v170, %v169
    %v182 = vpack.c.b16 %v172, %v171
    %v183 = vpack.c.b16 %v174, %v173
    %v184 = vpack.c.b16 %v176, %v175
    %193 = vmatprep.subr.bf16.mxu0 0
    %194 = vmatpush1.bf16.msra.mxu0 %v177
    %195 = vmatprep.subr.bf16.mxu0 0
    %196 = vmatpush1.bf16.msra.mxu0 %v178
    %197 = vmatprep.subr.bf16.mxu0 0
    %198 = vmatpush1.bf16.msra.mxu0 %v179
    %199 = vmatprep.subr.bf16.mxu0 0
    %200 = vmatpush1.bf16.msra.mxu0 %v180
    %201 = vmatprep.subr.bf16.mxu0 0
    %202 = vmatpush1.bf16.msra.mxu0 %v181
    %203 = vmatprep.subr.bf16.mxu0 0
    %204 = vmatpush1.bf16.msra.mxu0 %v182
    %205 = vmatprep.subr.bf16.mxu0 0
    %206 = vmatpush1.bf16.msra.mxu0 %v183
    %207 = vmatprep.subr.bf16.mxu0 0
    %208 = vmatpush1.bf16.msra.mxu0 %v184
    %209 = vmatprep.subr.bf16.mxu0 0
    %210 = vmatpush1.bf16.msra.mxu0 0
    %211 = vmatprep.subr.bf16.mxu0 0
    %212 = vmatpush1.bf16.msra.mxu0 0
    %213 = vmatprep.subr.bf16.mxu0 0
    %214 = vmatpush1.bf16.msra.mxu0 0
    %215 = vmatprep.subr.bf16.mxu0 0
    %216 = vmatpush1.bf16.msra.mxu0 0
    %217 = vmatprep.subr.bf16.mxu0 0
    %218 = vmatpush1.bf16.msra.mxu0 0
    %219 = vmatprep.subr.bf16.mxu0 0
    %220 = vmatpush1.bf16.msra.mxu0 0
    %221 = vmatprep.subr.bf16.mxu0 0
    %222 = vmatpush1.bf16.msra.mxu0 0
    %223 = vmatprep.subr.bf16.mxu0 0
    %224 = vmatpush1.bf16.msra.mxu0 0
    %225 = vmatprep.mubr.bf16.mxu0 0
    %226 = vmatmul.mubr.bf16.gmra.mrb[0].mxu0 %v121
    %v227 = vpop.f32.mrb[0].mxu0
    %v228 = vadd.f32 %v143, %v227
    %v229 = vpop.f32.mrb[0].mxu0
    %v230 = vpop.f32.mrb[0].mxu0
    %v231 = vpop.f32.mrb[0].mxu0
    %232 = vdwg.mxu0
    %v233 = vmax.f32 %v228, 0.0
    %v234 = vpack.c.bf16 %v233, %v233
    %v235 = vld [vmem:[#allocation9] sm:$0xf]
    %v236 = vld [vmem:[#allocation9 + $0x4] sm:$0xf]
    %v237 = vld [vmem:[#allocation9 + $0x8] sm:$0xf]
    %v238 = vld [vmem:[#allocation9 + $0xc] sm:$0xf]
    %v239 = vld [vmem:[#allocation9 + $0x10] sm:$0xf]
    %v240 = vld [vmem:[#allocation9 + $0x14] sm:$0xf]
    %v241 = vld [vmem:[#allocation9 + $0x18] sm:$0xf]
    %v242 = vld [vmem:[#allocation9 + $0x1c] sm:$0xf]
    %v243 = vld [vmem:[#allocation9 + $0x20] sm:$0xf]
    %v244 = vld [vmem:[#allocation9 + $0x24] sm:$0xf]
    %v245 = vld [vmem:[#allocation9 + $0x28] sm:$0xf]
    %v246 = vld [vmem:[#allocation9 + $0x2c] sm:$0xf]
    %v247 = vld [vmem:[#allocation9 + $0x30] sm:$0xf]
    %v248 = vld [vmem:[#allocation9 + $0x34] sm:$0xf]
    %v249 = vld [vmem:[#allocation9 + $0x38] sm:$0xf]
    %v250 = vld [vmem:[#allocation9 + $0x3c] sm:$0xf]
    %v251 = vld [vmem:[%s5] sm:$0x1]
    %v253 = vlaneseq
    %v254 = vshrl.u32 %v253, 7
    %v255 = vsub.s32 0, %v254
    %v256 = vrot.slane %v251, %v255
    %v274 = vunpack.c.l.b16 %v235
    %v275 = vunpack.c.l.b16 %v236
    %v276 = vunpack.c.l.b16 %v237
    %v277 = vunpack.c.l.b16 %v238
    %v278 = vunpack.c.l.b16 %v239
    %v279 = vunpack.c.l.b16 %v240
    %v280 = vunpack.c.l.b16 %v241
    %v281 = vunpack.c.l.b16 %v242
    %v282 = vunpack.c.l.b16 %v243
    %v283 = vunpack.c.l.b16 %v244
    %v284 = vunpack.c.l.b16 %v245
    %v285 = vunpack.c.l.b16 %v246
    %v286 = vunpack.c.l.b16 %v247
    %v287 = vunpack.c.l.b16 %v248
    %v288 = vunpack.c.l.b16 %v249
    %v289 = vunpack.c.l.b16 %v250
    %v290 = vpack.c.b16 %v275, %v274
    %v291 = vpack.c.b16 %v277, %v276
    %v292 = vpack.c.b16 %v279, %v278
    %v293 = vpack.c.b16 %v281, %v280
    %v294 = vpack.c.b16 %v283, %v282
    %v295 = vpack.c.b16 %v285, %v284
    %v296 = vpack.c.b16 %v287, %v286
    %v297 = vpack.c.b16 %v289, %v288
    %306 = vmatprep.subr.bf16.mxu0 0
    %307 = vmatpush1.bf16.msra.mxu0 %v290
    %308 = vmatprep.subr.bf16.mxu0 0
    %309 = vmatpush1.bf16.msra.mxu0 %v291
    %310 = vmatprep.subr.bf16.mxu0 0
    %311 = vmatpush1.bf16.msra.mxu0 %v292
    %312 = vmatprep.subr.bf16.mxu0 0
    %313 = vmatpush1.bf16.msra.mxu0 %v293
    %314 = vmatprep.subr.bf16.mxu0 0
    %315 = vmatpush1.bf16.msra.mxu0 %v294
    %316 = vmatprep.subr.bf16.mxu0 0
    %317 = vmatpush1.bf16.msra.mxu0 %v295
    %318 = vmatprep.subr.bf16.mxu0 0
    %319 = vmatpush1.bf16.msra.mxu0 %v296
    %320 = vmatprep.subr.bf16.mxu0 0
    %321 = vmatpush1.bf16.msra.mxu0 %v297
    %322 = vmatprep.subr.bf16.mxu0 0
    %323 = vmatpush1.bf16.msra.mxu0 0
    %324 = vmatprep.subr.bf16.mxu0 0
    %325 = vmatpush1.bf16.msra.mxu0 0
    %326 = vmatprep.subr.bf16.mxu0 0
    %327 = vmatpush1.bf16.msra.mxu0 0
    %328 = vmatprep.subr.bf16.mxu0 0
    %329 = vmatpush1.bf16.msra.mxu0 0
    %330 = vmatprep.subr.bf16.mxu0 0
    %331 = vmatpush1.bf16.msra.mxu0 0
    %332 = vmatprep.subr.bf16.mxu0 0
    %333 = vmatpush1.bf16.msra.mxu0 0
    %334 = vmatprep.subr.bf16.mxu0 0
    %335 = vmatpush1.bf16.msra.mxu0 0
    %336 = vmatprep.subr.bf16.mxu0 0
    %337 = vmatpush1.bf16.msra.mxu0 0
    %338 = vmatprep.mubr.bf16.mxu0 0
    %339 = vmatmul.mubr.bf16.gmra.mrb[0].mxu0 %v234
    %v340 = vpop.f32.mrb[0].mxu0
    %v341 = vadd.f32 %v256, %v340
    %v342 = vpop.f32.mrb[0].mxu0
    %v343 = vpop.f32.mrb[0].mxu0
    %v344 = vpop.f32.mrb[0].mxu0
    %345 = vdwg.mxu0
    %v346 = vmax.f32 %v341, 0.0
    %v347 = vadd.f32 %v120, %v346
    %v348 = vld [vmem:[#allocation6] sm:$0xff]
    %v349 = vld [vmem:[#allocation2] sm:$0xff]
    %vm350 = vcmask 64512
    %v352 = vsel %vm350, %v348, 0
    %354 = vmatprep.subr.mxu0 0.0
    %355 = vmatpush1.msra.mxu0 %v347
    %356 = vmatprep.subr.mxu0 0.0
    %357 = vmatpush1.msra.mxu0 0.0
    %358 = vmatprep.subr.mxu0 0.0
    %359 = vmatpush1.msra.mxu0 0.0
    %360 = vmatprep.subr.mxu0 0.0
    %361 = vmatpush1.msra.mxu0 0.0
    %362 = vmatprep.subr.mxu0 0.0
    %363 = vmatpush1.msra.mxu0 0.0
    %364 = vmatprep.subr.mxu0 0.0
    %365 = vmatpush1.msra.mxu0 0.0
    %366 = vmatprep.subr.mxu0 0.0
    %367 = vmatpush1.msra.mxu0 0.0
    %368 = vmatprep.subr.mxu0 0.0
    %369 = vmatpush1.msra.mxu0 0.0
    %370 = vmatprep.subr.mxu0 0.0
    %371 = vmatpush1.msra.mxu0 0.0
    %372 = vmatprep.subr.mxu0 0.0
    %373 = vmatpush1.msra.mxu0 0.0
    %374 = vmatprep.subr.mxu0 0.0
    %375 = vmatpush1.msra.mxu0 0.0
    %376 = vmatprep.subr.mxu0 0.0
    %377 = vmatpush1.msra.mxu0 0.0
    %378 = vmatprep.subr.mxu0 0.0
    %379 = vmatpush1.msra.mxu0 0.0
    %380 = vmatprep.subr.mxu0 0.0
    %381 = vmatpush1.msra.mxu0 0.0
    %382 = vmatprep.subr.mxu0 0.0
    %383 = vmatpush1.msra.mxu0 0.0
    %384 = vmatprep.subr.mxu0 0.0
    %385 = vmatpush1.msra.mxu0 0.0
    %386 = vmatprep.subr.mxu0 0.0
    %387 = vmatpush1.msra.mxu0 0.0
    %388 = vmatprep.subr.mxu0 0.0
    %389 = vmatpush1.msra.mxu0 0.0
    %390 = vmatprep.subr.mxu0 0.0
    %391 = vmatpush1.msra.mxu0 0.0
    %392 = vmatprep.subr.mxu0 0.0
    %393 = vmatpush1.msra.mxu0 0.0
    %394 = vmatprep.subr.mxu0 0.0
    %395 = vmatpush1.msra.mxu0 0.0
    %396 = vmatprep.subr.mxu0 0.0
    %397 = vmatpush1.msra.mxu0 0.0
    %398 = vmatprep.subr.mxu0 0.0
    %399 = vmatpush1.msra.mxu0 0.0
    %400 = vmatprep.subr.mxu0 0.0
    %401 = vmatpush1.msra.mxu0 0.0
    %402 = vmatprep.subr.mxu0 0.0
    %403 = vmatpush1.msra.mxu0 0.0
    %404 = vmatprep.subr.mxu0 0.0
    %405 = vmatpush1.msra.mxu0 0.0
    %406 = vmatprep.subr.mxu0 0.0
    %407 = vmatpush1.msra.mxu0 0.0
    %408 = vmatprep.subr.mxu0 0.0
    %409 = vmatpush1.msra.mxu0 0.0
    %410 = vmatprep.subr.mxu0 0.0
    %411 = vmatpush1.msra.mxu0 0.0
    %412 = vmatprep.subr.mxu0 0.0
    %413 = vmatpush1.msra.mxu0 0.0
    %414 = vmatprep.subr.mxu0 0.0
    %415 = vmatpush1.msra.mxu0 0.0
    %416 = vmatprep.subr.mxu0 0.0
    %417 = vmatpush1.msra.mxu0 0.0
    %418 = vmatprep.mubr.f32.mxu0 0.0
    %419 = vmatmul.mubr.f32.gmra.mrb[0].mxu0 %v352
    %v420 = vpop.f32.mrb[0].mxu0
    %v421 = vadd.f32 0.0, %v420
    %v422 = vpop.f32.mrb[0].mxu0
    %423 = vdwg.mxu0
    %v424 = vadd.f32 %v349, %v421
    %425 = vst [vmem:[#allocation2] sm:$0xff] %v424
    // Predicated region
    $region70: #{tpu_custom_call.1} parent=1 // pred_check
      %p426 = pneg %p115
    $region71: #{tpu_custom_call.1} parent=1 // pred_check_branch
      %428 = sbr.rel (%p426) target = $region73
    $region72: #{tpu_custom_call.1} parent=1 // pred_region
      %v429 = vld [vmem:[#allocation2] sm:$0xff]
      %v430 = vld [vmem:[#allocation11] sm:$0xff]
      %v431 = vld [vmem:[#allocation11 + $0x8] sm:$0xff]
      %v432 = vld [vmem:[#allocation11 + $0x10] sm:$0xff]
      %v433 = vld [vmem:[#allocation11 + $0x18] sm:$0xff]
      %v434 = vld [vmem:[#allocation11 + $0x20] sm:$0xff]
      %v435 = vld [vmem:[#allocation11 + $0x28] sm:$0xff]
      %v436 = vld [vmem:[#allocation11 + $0x30] sm:$0xff]
      %v437 = vld [vmem:[#allocation11 + $0x38] sm:$0xff]
      %v438 = vld [vmem:[#allocation11 + $0x40] sm:$0xff]
      %v439 = vld [vmem:[#allocation11 + $0x48] sm:$0xff]
      %v440 = vld [vmem:[#allocation11 + $0x50] sm:$0xff]
      %v441 = vld [vmem:[#allocation11 + $0x58] sm:$0xff]
      %v442 = vld [vmem:[#allocation11 + $0x60] sm:$0xff]
      %v443 = vld [vmem:[#allocation11 + $0x68] sm:$0xff]
      %v444 = vld [vmem:[#allocation11 + $0x70] sm:$0xff]
      %v445 = vld [vmem:[#allocation11 + $0x78] sm:$0xff]
      %v446 = vld [vmem:[%s7] sm:$0x1]
      %v448 = vlaneseq
      %v449 = vshrl.u32 %v448, 7
      %v450 = vsub.s32 0, %v449
      %v451 = vrot.slane %v446, %v450
      %453 = vmatprep.subr.mxu0 0.0
      %454 = vmatpush1.msra.mxu0 %v430
      %455 = vmatprep.subr.mxu0 0.0
      %456 = vmatpush1.msra.mxu0 %v431
      %457 = vmatprep.subr.mxu0 0.0
      %458 = vmatpush1.msra.mxu0 %v432
      %459 = vmatprep.subr.mxu0 0.0
      %460 = vmatpush1.msra.mxu0 %v433
      %461 = vmatprep.subr.mxu0 0.0
      %462 = vmatpush1.msra.mxu0 %v434
      %463 = vmatprep.subr.mxu0 0.0
      %464 = vmatpush1.msra.mxu0 %v435
      %465 = vmatprep.subr.mxu0 0.0
      %466 = vmatpush1.msra.mxu0 %v436
      %467 = vmatprep.subr.mxu0 0.0
      %468 = vmatpush1.msra.mxu0 %v437
      %469 = vmatprep.subr.mxu0 0.0
      %470 = vmatpush1.msra.mxu0 %v438
      %471 = vmatprep.subr.mxu0 0.0
      %472 = vmatpush1.msra.mxu0 %v439
      %473 = vmatprep.subr.mxu0 0.0
      %474 = vmatpush1.msra.mxu0 %v440
      %475 = vmatprep.subr.mxu0 0.0
      %476 = vmatpush1.msra.mxu0 %v441
      %477 = vmatprep.subr.mxu0 0.0
      %478 = vmatpush1.msra.mxu0 %v442
      %479 = vmatprep.subr.mxu0 0.0
      %480 = vmatpush1.msra.mxu0 %v443
      %481 = vmatprep.subr.mxu0 0.0
      %482 = vmatpush1.msra.mxu0 %v444
      %483 = vmatprep.subr.mxu0 0.0
      %484 = vmatpush1.msra.mxu0 %v445
      %485 = vmatprep.subr.mxu0 0.0
      %486 = vmatpush1.msra.mxu0 0.0
      %487 = vmatprep.subr.mxu0 0.0
      %488 = vmatpush1.msra.mxu0 0.0
      %489 = vmatprep.subr.mxu0 0.0
      %490 = vmatpush1.msra.mxu0 0.0
      %491 = vmatprep.subr.mxu0 0.0
      %492 = vmatpush1.msra.mxu0 0.0
      %493 = vmatprep.subr.mxu0 0.0
      %494 = vmatpush1.msra.mxu0 0.0
      %495 = vmatprep.subr.mxu0 0.0
      %496 = vmatpush1.msra.mxu0 0.0
      %497 = vmatprep.subr.mxu0 0.0
      %498 = vmatpush1.msra.mxu0 0.0
      %499 = vmatprep.subr.mxu0 0.0
      %500 = vmatpush1.msra.mxu0 0.0
      %501 = vmatprep.subr.mxu0 0.0
      %502 = vmatpush1.msra.mxu0 0.0
      %503 = vmatprep.subr.mxu0 0.0
      %504 = vmatpush1.msra.mxu0 0.0
      %505 = vmatprep.subr.mxu0 0.0
      %506 = vmatpush1.msra.mxu0 0.0
      %507 = vmatprep.subr.mxu0 0.0
      %508 = vmatpush1.msra.mxu0 0.0
      %509 = vmatprep.subr.mxu0 0.0
      %510 = vmatpush1.msra.mxu0 0.0
      %511 = vmatprep.subr.mxu0 0.0
      %512 = vmatpush1.msra.mxu0 0.0
      %513 = vmatprep.subr.mxu0 0.0
      %514 = vmatpush1.msra.mxu0 0.0
      %515 = vmatprep.subr.mxu0 0.0
      %516 = vmatpush1.msra.mxu0 0.0
      %517 = vmatprep.mubr.f32.mxu0 0.0
      %518 = vmatmul.mubr.f32.gmra.mrb[0].mxu0 %v429
      %v519 = vpop.f32.mrb[0].mxu0
      %v520 = vadd.f32 %v451, %v519
      %v521 = vpop.f32.mrb[0].mxu0
      %522 = vdwg.mxu0
      %v523 = vmax.f32 %v520, 0.0
      %v524 = vld [vmem:[#allocation12] sm:$0xff]
      %v525 = vld [vmem:[#allocation12 + $0x8] sm:$0xff]
      %v526 = vld [vmem:[#allocation12 + $0x10] sm:$0xff]
      %v527 = vld [vmem:[#allocation12 + $0x18] sm:$0xff]
      %v528 = vld [vmem:[#allocation12 + $0x20] sm:$0xff]
      %v529 = vld [vmem:[#allocation12 + $0x28] sm:$0xff]
      %v530 = vld [vmem:[#allocation12 + $0x30] sm:$0xff]
      %v531 = vld [vmem:[#allocation12 + $0x38] sm:$0xff]
      %v532 = vld [vmem:[#allocation12 + $0x40] sm:$0xff]
      %v533 = vld [vmem:[#allocation12 + $0x48] sm:$0xff]
      %v534 = vld [vmem:[#allocation12 + $0x50] sm:$0xff]
      %v535 = vld [vmem:[#allocation12 + $0x58] sm:$0xff]
      %v536 = vld [vmem:[#allocation12 + $0x60] sm:$0xff]
      %v537 = vld [vmem:[#allocation12 + $0x68] sm:$0xff]
      %v538 = vld [vmem:[#allocation12 + $0x70] sm:$0xff]
      %v539 = vld [vmem:[#allocation12 + $0x78] sm:$0xff]
      %v540 = vld [vmem:[%s9] sm:$0x1]
      %v542 = vlaneseq
      %v543 = vshrl.u32 %v542, 7
      %v544 = vsub.s32 0, %v543
      %v545 = vrot.slane %v540, %v544
      %547 = vmatprep.subr.mxu0 0.0
      %548 = vmatpush1.msra.mxu0 %v524
      %549 = vmatprep.subr.mxu0 0.0
      %550 = vmatpush1.msra.mxu0 %v525
      %551 = vmatprep.subr.mxu0 0.0
      %552 = vmatpush1.msra.mxu0 %v526
      %553 = vmatprep.subr.mxu0 0.0
      %554 = vmatpush1.msra.mxu0 %v527
      %555 = vmatprep.subr.mxu0 0.0
      %556 = vmatpush1.msra.mxu0 %v528
      %557 = vmatprep.subr.mxu0 0.0
      %558 = vmatpush1.msra.mxu0 %v529
      %559 = vmatprep.subr.mxu0 0.0
      %560 = vmatpush1.msra.mxu0 %v530
      %561 = vmatprep.subr.mxu0 0.0
      %562 = vmatpush1.msra.mxu0 %v531
      %563 = vmatprep.subr.mxu0 0.0
      %564 = vmatpush1.msra.mxu0 %v532
      %565 = vmatprep.subr.mxu0 0.0
      %566 = vmatpush1.msra.mxu0 %v533
      %567 = vmatprep.subr.mxu0 0.0
      %568 = vmatpush1.msra.mxu0 %v534
      %569 = vmatprep.subr.mxu0 0.0
      %570 = vmatpush1.msra.mxu0 %v535
      %571 = vmatprep.subr.mxu0 0.0
      %572 = vmatpush1.msra.mxu0 %v536
      %573 = vmatprep.subr.mxu0 0.0
      %574 = vmatpush1.msra.mxu0 %v537
      %575 = vmatprep.subr.mxu0 0.0
      %576 = vmatpush1.msra.mxu0 %v538
      %577 = vmatprep.subr.mxu0 0.0
      %578 = vmatpush1.msra.mxu0 %v539
      %579 = vmatprep.subr.mxu0 0.0
      %580 = vmatpush1.msra.mxu0 0.0
      %581 = vmatprep.subr.mxu0 0.0
      %582 = vmatpush1.msra.mxu0 0.0
      %583 = vmatprep.subr.mxu0 0.0
      %584 = vmatpush1.msra.mxu0 0.0
      %585 = vmatprep.subr.mxu0 0.0
      %586 = vmatpush1.msra.mxu0 0.0
      %587 = vmatprep.subr.mxu0 0.0
      %588 = vmatpush1.msra.mxu0 0.0
      %589 = vmatprep.subr.mxu0 0.0
      %590 = vmatpush1.msra.mxu0 0.0
      %591 = vmatprep.subr.mxu0 0.0
      %592 = vmatpush1.msra.mxu0 0.0
      %593 = vmatprep.subr.mxu0 0.0
      %594 = vmatpush1.msra.mxu0 0.0
      %595 = vmatprep.subr.mxu0 0.0
      %596 = vmatpush1.msra.mxu0 0.0
      %597 = vmatprep.subr.mxu0 0.0
      %598 = vmatpush1.msra.mxu0 0.0
      %599 = vmatprep.subr.mxu0 0.0
      %600 = vmatpush1.msra.mxu0 0.0
      %601 = vmatprep.subr.mxu0 0.0
      %602 = vmatpush1.msra.mxu0 0.0
      %603 = vmatprep.subr.mxu0 0.0
      %604 = vmatpush1.msra.mxu0 0.0
      %605 = vmatprep.subr.mxu0 0.0
      %606 = vmatpush1.msra.mxu0 0.0
      %607 = vmatprep.subr.mxu0 0.0
      %608 = vmatpush1.msra.mxu0 0.0
      %609 = vmatprep.subr.mxu0 0.0
      %610 = vmatpush1.msra.mxu0 0.0
      %611 = vmatprep.mubr.f32.mxu0 0.0
      %612 = vmatmul.mubr.f32.gmra.mrb[0].mxu0 %v523
      %v613 = vpop.f32.mrb[0].mxu0
      %v614 = vadd.f32 %v545, %v613
      %v615 = vpop.f32.mrb[0].mxu0
      %616 = vdwg.mxu0
      %617 = vst [vmem:[#allocation14] sm:$0xff] %v614
    $region73: #{tpu_custom_call.1} parent=1 // pred_fallthru
      _
    // Predicated region
    $region74: #{tpu_custom_call.1} parent=1 // pred_check
      _
    $region75: #{tpu_custom_call.1} parent=1 // pred_check_branch
      %619 = sbr.rel (0) target = $region77
    $region76: #{tpu_custom_call.1} parent=1 // pred_region
      %s621 = ssub.s32 128, 128
      %622 = vsyncadd [#allocation5], %s621
      %s624 = sshll.u32 [#allocation14], 4
      %s625 = int_to_ptr.vmem [resolvable:$true] %s624
      %627 = dma.vmem_to_hbm [thread:$0]  %s625, 128, %s10, [#allocation5]
    $region77: #{tpu_custom_call.1} parent=1 // pred_fallthru
      _
    // Predicated region
    $region78: #{tpu_custom_call.1} parent=1 // pred_check
      _
    $region79: #{tpu_custom_call.1} parent=1 // pred_check_branch
      %629 = sbr.rel (0) target = $region81
    $region80: #{tpu_custom_call.1} parent=1 // pred_region
      %630 = dma.done [#allocation5], 128
    $region81: #{tpu_custom_call.1} parent=1 // pred_fallthru
      _
    %631 = vsyncpa [#allocation4], 1
    %632 = vsyncpa [#allocation7], 1
    %633 = vsyncpa [#allocation10], 1
    %634 = vsyncpa [#allocation13], 1
    %635 = vsyncpa [#allocation5], 1

</llo_original>
